<compile_context>
chip_gen: v5e
topology: v5e:2x2
jax: 0.10.0
libtpu: 0.0.40
codegen_flags: <defaults>
</compile_context>

<pallas_src>
import functools

import jax
import jax.numpy as jnp
from jax.experimental import pallas as pl
from jax.experimental.pallas import tpu as pltpu

LN_EPS = 1e-12
INV_SQRT2 = 0.7071067811865476
_VMEM_LIMIT = 48 * 1024 * 1024  # explicit scoped-VMEM cap, safe on v5e/v6e/v7x


def _pick_tile(dim, candidates):
    """Largest candidate that evenly divides dim, else the full dim."""
    for c in candidates:
        if dim >= c and dim % c == 0:
            return c
    return dim


def _dense_gelu_stats_kernel(x_ref, wd_ref, bd_ref, h_ref, stats_ref):
    # x_ref:     (1, tile_s, H) bf16     current rows of this batch element
    # wd_ref:    (H, H)        bf16      dense weight (in, out)
    # bd_ref:    (1, H)        f32       dense bias
    # h_ref:     (1, tile_s, H) bf16     GELU(dense(x)) written back to HBM
    # stats_ref: (1, 2, 128)   f32       [sum, sum_of_squares] per batch element
    si = pl.program_id(1)

    @pl.when(si == 0)
    def _():
        stats_ref[...] = jnp.zeros_like(stats_ref)

    x = x_ref[0]                                                   # (tile_s, H) bf16
    h = jnp.dot(x, wd_ref[...], preferred_element_type=jnp.float32)
    h = h + bd_ref[...]                                            # f32
    # exact (erf-based) GELU, matching torch.nn.functional.gelu default
    h = 0.5 * h * (1.0 + jax.lax.erf(h * INV_SQRT2))
    # TODO(synk): training-mode dropout (p=0.5) not implemented; eval (identity) semantics.

    psum = jnp.sum(h)
    psumsq = jnp.sum(h * h)
    row_ids = jax.lax.broadcasted_iota(jnp.int32, (2, 128), 0)
    part = jnp.where(row_ids == 0, psum, psumsq)                   # (2, 128) f32
    stats_ref[0] += part

    h_ref[0] = h.astype(h_ref.dtype)


def _ln_decoder_kernel(h_ref, stats_ref, gamma_ref, beta_ref, wdec_ref, o_ref,
                       *, inv_count):
    # h_ref:     (1, tile_s, H)      bf16
    # stats_ref: (1, 2, 128)         f32   [sum, sum_sq] for this batch element
    # gamma/beta:(1, H)              f32
    # wdec_ref:  (H, tile_e)         bf16
    # o_ref:     (1, tile_s, tile_e) f32
    h = h_ref[0].astype(jnp.float32)                               # (tile_s, H)

    u = stats_ref[0, 0, 0] * inv_count                             # mean over (S, H)
    msq = stats_ref[0, 1, 0] * inv_count                           # mean of squares
    var = msq - u * u
    inv_std = jax.lax.rsqrt(var + LN_EPS)

    hn = (h - u) * inv_std
    hn = gamma_ref[...] * hn + beta_ref[...]

    o_ref[0] = jnp.dot(hn.astype(jnp.bfloat16), wdec_ref[...],
                       preferred_element_type=jnp.float32).astype(o_ref.dtype)


def entlm_head(features, w_dense, b_dense, gamma, beta, w_dec):
    B, S, H = features.shape
    E = w_dec.shape[1]

    tile_s = _pick_tile(S, (512, 256, 128, 64, 32, 16, 8))
    tile_e = _pick_tile(E, (512, 256, 128))  # lane-dense (multiple of 128) when possible
    n_s = S // tile_s
    n_e = E // tile_e

    # bf16 MXU operands (f32 accumulation inside the kernels); bias/affine stay f32.
    x_bf = features.astype(jnp.bfloat16)
    wd_bf = w_dense.astype(jnp.bfloat16)
    wdec_bf = w_dec.astype(jnp.bfloat16)
    bd2 = b_dense.reshape(1, H).astype(jnp.float32)
    gamma2 = gamma.reshape(1, H).astype(jnp.float32)
    beta2 = beta.reshape(1, H).astype(jnp.float32)

    # ---- pass 1: dense + GELU + per-batch-element LN statistics ------------
    h, stats = pl.pallas_call(
        _dense_gelu_stats_kernel,
        out_shape=(
            jax.ShapeDtypeStruct((B, S, H), jnp.bfloat16),
            jax.ShapeDtypeStruct((B, 2, 128), jnp.float32),
        ),
        grid_spec=pltpu.PrefetchScalarGridSpec(
            num_scalar_prefetch=0,
            grid=(B, n_s),
            in_specs=[
                pl.BlockSpec((1, tile_s, H), lambda b, s: (b, s, 0)),
                pl.BlockSpec((H, H), lambda b, s: (0, 0)),
                pl.BlockSpec((1, H), lambda b, s: (0, 0)),
            ],
            out_specs=(
                pl.BlockSpec((1, tile_s, H), lambda b, s: (b, s, 0)),
                pl.BlockSpec((1, 2, 128), lambda b, s: (b, 0, 0)),  # resident accumulator
            ),
        ),
        compiler_params=pltpu.CompilerParams(
            dimension_semantics=("parallel", "arbitrary"),
            vmem_limit_bytes=_VMEM_LIMIT,
        ),
    )(x_bf, wd_bf, bd2)

    # ---- pass 2: global LayerNorm + decoder (E tiled, lane-dense output) ----
    out = pl.pallas_call(
        functools.partial(_ln_decoder_kernel, inv_count=1.0 / float(S * H)),
        out_shape=jax.ShapeDtypeStruct((B, S, E), jnp.float32),
        grid_spec=pltpu.PrefetchScalarGridSpec(
            num_scalar_prefetch=0,
            grid=(B, n_s, n_e),
            in_specs=[
                pl.BlockSpec((1, tile_s, H), lambda b, s, e: (b, s, 0)),
                pl.BlockSpec((1, 2, 128), lambda b, s, e: (b, 0, 0)),
                pl.BlockSpec((1, H), lambda b, s, e: (0, 0)),
                pl.BlockSpec((1, H), lambda b, s, e: (0, 0)),
                pl.BlockSpec((H, tile_e), lambda b, s, e: (0, e)),
            ],
            out_specs=pl.BlockSpec((1, tile_s, tile_e), lambda b, s, e: (b, s, e)),
        ),
        compiler_params=pltpu.CompilerParams(
            dimension_semantics=("parallel", "parallel", "parallel"),
            vmem_limit_bytes=_VMEM_LIMIT,
        ),
    )(h, stats, gamma2, beta2, wdec_bf)

    return out


def entlm_head_ref(features, w_dense, b_dense, gamma, beta, w_dec):
    h = jnp.einsum("bsh,ho->bso", features, w_dense) + b_dense
    h = 0.5 * h * (1.0 + jax.lax.erf(h * INV_SQRT2))
    u = jnp.mean(h, axis=(1, 2), keepdims=True)
    s = jnp.mean((h - u) ** 2, axis=(1, 2), keepdims=True)
    h = (h - u) / jnp.sqrt(s + LN_EPS)
    h = gamma * h + beta
    return jnp.einsum("bsh,he->bse", h, w_dec)


if __name__ == "__main__":
    B, S, H, E = 2, 8, 32, 16  # batch, seq, hidden_size, num_ent

    key = jax.random.PRNGKey(0)
    k_x, k_wd, k_bd, k_wdec = jax.random.split(key, 4)

    features = jax.random.normal(k_x, (B, S, H), dtype=jnp.float32)
    # deterministic synthetic parameters (Linear weights stored as (in, out))
    w_dense = jax.random.normal(k_wd, (H, H), dtype=jnp.float32) * 0.05
    b_dense = jax.random.normal(k_bd, (H,), dtype=jnp.float32) * 0.05
    gamma = jnp.ones((H,), dtype=jnp.float32)
    beta = jnp.zeros((H,), dtype=jnp.float32)
    w_dec = jax.random.normal(k_wdec, (H, E), dtype=jnp.float32) * 0.05

    out = entlm_head(features, w_dense, b_dense, gamma, beta, w_dec)
    out = jax.block_until_ready(out)

    ref = entlm_head_ref(features, w_dense, b_dense, gamma, beta, w_dec)
    assert out.shape == (B, S, E)
    # bf16 MXU operands -> compare with a bf16-appropriate tolerance
    rel_err = jnp.linalg.norm(out - ref) / (jnp.linalg.norm(ref) + 1e-12)
    assert rel_err < 5e-2, f"relative error too large: {rel_err}"

    print("KERNEL_OK")
</pallas_src>

<mosaic_0001>
module attributes {stable_mosaic.version = 11 : i64} {
  func.func @_dense_gelu_stats_kernel(%arg0: i32, %arg1: i32, %arg2: memref<1x8x32xbf16, #tpu.memory_space<vmem>>, %arg3: memref<32x32xbf16, #tpu.memory_space<vmem>>, %arg4: memref<1x32xf32, #tpu.memory_space<vmem>>, %arg5: memref<1x8x32xbf16, #tpu.memory_space<vmem>>, %arg6: memref<1x2x128xf32, #tpu.memory_space<vmem>>) attributes {dimension_semantics = [#tpu.dimension_semantics<parallel>, #tpu.dimension_semantics<arbitrary>], iteration_bounds = array<i64: 2, 1>, scalar_prefetch = 0 : i64, scratch_operands = 0 : i64, tpu.core_type = #tpu.core_type<tc>, window_params = [{transform_indices = @transform_0, window_bounds = array<i64: 1, 8, 32>}, {pipeline_mode = #tpu.pipeline_mode<synchronous>, transform_indices = @transform_1, window_bounds = array<i64: 32, 32>}, {pipeline_mode = #tpu.pipeline_mode<synchronous>, transform_indices = @transform_2, window_bounds = array<i64: 1, 32>}, {transform_indices = @transform_3, window_bounds = array<i64: 1, 8, 32>}, {transform_indices = @transform_4, window_bounds = array<i64: 1, 2, 128>}]} {
    %c0_i32 = arith.constant 0 : i32
    %0 = arith.cmpi eq, %arg1, %c0_i32 : i32
    %1 = arith.extui %0 : i1 to i32
    %c0_i32_0 = arith.constant 0 : i32
    %2 = arith.cmpi ne, %1, %c0_i32_0 : i32
    scf.if %2 {
      %cst_22 = arith.constant 0.000000e+00 : f32
      %43 = vector.broadcast %cst_22 : f32 to vector<1x2x128xf32>
      %c0_23 = arith.constant 0 : index
      %c0_24 = arith.constant 0 : index
      %c0_25 = arith.constant 0 : index
      %44 = vector.load %arg6[%c0_23, %c0_24, %c0_25] : memref<1x2x128xf32, #tpu.memory_space<vmem>>, vector<1x2x128xf32>
      tpu.vector_store %arg6[%c0_23, %c0_24, %c0_25], %43 {strides = array<i32>} : memref<1x2x128xf32, #tpu.memory_space<vmem>>, vector<1x2x128xf32>,
    } else {
    }
    %c0 = arith.constant 0 : index
    %c0_1 = arith.constant 0 : index
    %c0_2 = arith.constant 0 : index
    %3 = vector.load %arg2[%c0, %c0_1, %c0_2] : memref<1x8x32xbf16, #tpu.memory_space<vmem>>, vector<1x8x32xbf16>
    %4 = vector.shape_cast %3 : vector<1x8x32xbf16> to vector<8x32xbf16>
    %c0_3 = arith.constant 0 : index
    %c0_4 = arith.constant 0 : index
    %5 = vector.load %arg3[%c0_3, %c0_4] : memref<32x32xbf16, #tpu.memory_space<vmem>>, vector<32x32xbf16>
    %cst = arith.constant dense<0.000000e+00> : vector<8x32xf32>
    %6 = tpu.matmul %4, %5, %cst {dimension_numbers = #tpu.dot_dimension_numbers<[1], [0], [0], [1], [0, 0, 1, 1], [], []>} : vector<8x32xbf16>, vector<32x32xbf16>, vector<8x32xf32> -> vector<8x32xf32>
    %c0_5 = arith.constant 0 : index
    %c0_6 = arith.constant 0 : index
    %7 = vector.load %arg4[%c0_5, %c0_6] : memref<1x32xf32, #tpu.memory_space<vmem>>, vector<1x32xf32>
    %8 = vector.broadcast %7 : vector<1x32xf32> to vector<8x32xf32>
    %9 = arith.addf %6, %8 : vector<8x32xf32>
    %cst_7 = arith.constant 5.000000e-01 : f32
    %10 = vector.broadcast %cst_7 : f32 to vector<8x32xf32>
    %11 = arith.mulf %10, %9 : vector<8x32xf32>
    %cst_8 = arith.constant 0.707106769 : f32
    %12 = vector.broadcast %cst_8 : f32 to vector<8x32xf32>
    %13 = arith.mulf %9, %12 : vector<8x32xf32>
    %14 = math.erf %13 : vector<8x32xf32>
    %cst_9 = arith.constant 1.000000e+00 : f32
    %15 = vector.broadcast %cst_9 : f32 to vector<8x32xf32>
    %16 = arith.addf %15, %14 : vector<8x32xf32>
    %17 = arith.mulf %11, %16 : vector<8x32xf32>
    %18 = vector.shape_cast %17 : vector<8x32xf32> to vector<1x8x32xf32>
    %cst_10 = arith.constant dense<0.000000e+00> : vector<1xf32>
    %19 = vector.multi_reduction <add>, %18, %cst_10 [1, 2] : vector<1x8x32xf32> to vector<1xf32>
    %20 = vector.shape_cast %19 : vector<1xf32> to vector<1x1x1xf32>
    %21 = vector.extract %20[0, 0, 0] : f32 from vector<1x1x1xf32>
    %22 = arith.mulf %17, %17 : vector<8x32xf32>
    %23 = vector.shape_cast %22 : vector<8x32xf32> to vector<1x8x32xf32>
    %cst_11 = arith.constant dense<0.000000e+00> : vector<1xf32>
    %24 = vector.multi_reduction <add>, %23, %cst_11 [1, 2] : vector<1x8x32xf32> to vector<1xf32>
    %25 = vector.shape_cast %24 : vector<1xf32> to vector<1x1x1xf32>
    %26 = vector.extract %25[0, 0, 0] : f32 from vector<1x1x1xf32>
    %27 = tpu.iota {dimensions = array<i32: 0>} : vector<2x128xi32>
    %c0_i32_12 = arith.constant 0 : i32
    %28 = vector.broadcast %c0_i32_12 : i32 to vector<2x128xi32>
    %29 = arith.cmpi eq, %27, %28 : vector<2x128xi32>
    %30 = vector.broadcast %21 : f32 to vector<2x128xf32>
    %31 = vector.broadcast %26 : f32 to vector<2x128xf32>
    %32 = arith.select %29, %30, %31 : vector<2x128xi1>, vector<2x128xf32>
    %c0_13 = arith.constant 0 : index
    %c0_14 = arith.constant 0 : index
    %c0_15 = arith.constant 0 : index
    %33 = vector.load %arg6[%c0_13, %c0_14, %c0_15] : memref<1x2x128xf32, #tpu.memory_space<vmem>>, vector<1x2x128xf32>
    %34 = vector.shape_cast %33 : vector<1x2x128xf32> to vector<2x128xf32>
    %35 = arith.addf %34, %32 : vector<2x128xf32>
    %c0_16 = arith.constant 0 : index
    %c0_17 = arith.constant 0 : index
    %c0_18 = arith.constant 0 : index
    %36 = vector.load %arg6[%c0_16, %c0_17, %c0_18] : memref<1x2x128xf32, #tpu.memory_space<vmem>>, vector<1x2x128xf32>
    %37 = vector.shape_cast %36 : vector<1x2x128xf32> to vector<2x128xf32>
    %38 = vector.shape_cast %35 : vector<2x128xf32> to vector<1x2x128xf32>
    tpu.vector_store %arg6[%c0_16, %c0_17, %c0_18], %38 {strides = array<i32>} : memref<1x2x128xf32, #tpu.memory_space<vmem>>, vector<1x2x128xf32>,
    %39 = arith.truncf %17 : vector<8x32xf32> to vector<8x32xbf16>
    %c0_19 = arith.constant 0 : index
    %c0_20 = arith.constant 0 : index
    %c0_21 = arith.constant 0 : index
    %40 = vector.load %arg5[%c0_19, %c0_20, %c0_21] : memref<1x8x32xbf16, #tpu.memory_space<vmem>>, vector<1x8x32xbf16>
    %41 = vector.shape_cast %40 : vector<1x8x32xbf16> to vector<8x32xbf16>
    %42 = vector.shape_cast %39 : vector<8x32xbf16> to vector<1x8x32xbf16>
    tpu.vector_store %arg5[%c0_19, %c0_20, %c0_21], %42 {strides = array<i32>} : memref<1x8x32xbf16, #tpu.memory_space<vmem>>, vector<1x8x32xbf16>,
    return
  }
  func.func @transform_0(%arg0: i32, %arg1: i32) -> (i32, i32, i32) {
    %c0_i32 = arith.constant 0 : i32
    %c0_i32_0 = arith.constant 0 : i32
    return %arg0, %arg1, %c0_i32 : i32, i32, i32
  }
  func.func @transform_1(%arg0: i32, %arg1: i32) -> (i32, i32) {
    %c0_i32 = arith.constant 0 : i32
    %c0_i32_0 = arith.constant 0 : i32
    %c0_i32_1 = arith.constant 0 : i32
    return %c0_i32, %c0_i32_0 : i32, i32
  }
  func.func @transform_2(%arg0: i32, %arg1: i32) -> (i32, i32) {
    %c0_i32 = arith.constant 0 : i32
    %c0_i32_0 = arith.constant 0 : i32
    %c0_i32_1 = arith.constant 0 : i32
    return %c0_i32, %c0_i32_0 : i32, i32
  }
  func.func @transform_3(%arg0: i32, %arg1: i32) -> (i32, i32, i32) {
    %c0_i32 = arith.constant 0 : i32
    %c0_i32_0 = arith.constant 0 : i32
    return %arg0, %arg1, %c0_i32 : i32, i32, i32
  }
  func.func @transform_4(%arg0: i32, %arg1: i32) -> (i32, i32, i32) {
    %c0_i32 = arith.constant 0 : i32
    %c0_i32_0 = arith.constant 0 : i32
    %c0_i32_1 = arith.constant 0 : i32
    return %arg0, %c0_i32, %c0_i32_0 : i32, i32, i32
  }
}

</mosaic_0001>

<llo_original>
// kernel: tpu_custom_call.1
$region0: #{tpu_custom_call.1}
  #allocation0 [shape = 'u32[]', space=smem, size = 0x4, offset = 0x4, fixed_abs, tag = 'smem constant byte address 0x4 - core index']
  #allocation1 [shape = 'u32[72,128]{1,0:T(1,128)}', space=vmem, size = 0x9000, scoped, tag = 'internal scratch']
  %s0 = inlined_call_operand.hbm [shape: bf16[2,8,32], index: 0, kind: input, shape index: {}]
  %s1 = inlined_call_operand.hbm [shape: bf16[32,32], index: 1, kind: input, shape index: {}]
  %s2 = inlined_call_operand.vmem [shape: f32[1,32], index: 2, kind: input, shape index: {}]
  %s3 = inlined_call_operand.hbm [shape: bf16[2,8,32], index: 3, kind: output, shape index: {0}]
  %s4 = inlined_call_operand.hbm [shape: f32[2,2,128], index: 4, kind: output, shape index: {1}]
  %5 = xla_tuple %s3, %s4
  %s6 = sld [smem:[#allocation0]]
  $region65: #{tpu_custom_call.1} parent=0
    _
  %s8 = ssub.s32 1, %s6
  %s9 = scalar_select 0, %s8, %s6
  $region1: #{tpu_custom_call.1} parent=0
    #allocation2 [shape = 'u8[4096]{0}', space=vmem, size = 0x1000, scoped, tag = 'input window, operand 0']
    #allocation3 [shape = 's32[2]{0}', space=sflag, size = 0x8, scoped, tag = 'scoped memory for tpu_custom_call.1']
    #allocation4 [shape = 's32[2]{0}', space=sflag, size = 0x8, scoped, tag = 'scoped memory for tpu_custom_call.1']
    #allocation5 [shape = 'u8[8192]{0}', space=vmem, size = 0x2000, scoped, tag = 'input window, operand 1, single buffered']
    #allocation6 [shape = 's32[1]{0}', space=sflag, size = 0x4, scoped, tag = 'scoped memory for tpu_custom_call.1']
    #allocation7 [shape = 'u8[4096]{0}', space=vmem, size = 0x1000, scoped, tag = 'output window, operand 0']
    #allocation8 [shape = 'u8[2048]{0}', space=vmem, size = 0x800, scoped, tag = 'output window, operand 1']
    #allocation9 [shape = 's32[2]{0}', space=sflag, size = 0x8, scoped, tag = 'scoped memory for tpu_custom_call.1']
    %10 = vsyncpa [#allocation3], 0
    %s11 = scalar_lea.sflag [#allocation3], 1
    %12 = vsyncpa %s11, 0
    %13 = vsyncpa [#allocation6], 0
    %14 = vsyncpa [#allocation4], 0
    %s15 = scalar_lea.sflag [#allocation4], 1
    %16 = vsyncpa %s15, 0
    %17 = vsyncpa [#allocation9], 0
    %s18 = scalar_lea.sflag [#allocation9], 1
    %19 = vsyncpa %s18, 0
    loop: start=0, step=1, limit=4
    $region2: #{tpu_custom_call.1} parent=1 // loop_pre_header
      _
    $region3: #{tpu_custom_call.1} parent=1 // loop_header
      %s21 = sphi 0, %s25
      %p22 = scmp.ge.s32.totalorder %s21, 4
      %s28 = sphi 0, %s40
      %s29 = sphi 0, %s36
      %s30 = sphi 0, %s28
      %s31 = sphi 0, %s29
      %s32 = sphi 0, %s30
      %s33 = sphi 0, %s31
      %s45 = sphi 0, %s47
      %s48 = sphi 0, %s45
      %s49 = sphi 0, %s48
      %s65 = sphi 0, %s49
      %s69 = sphi 0, %s69
      %s71 = sphi 0, %s69
      %s72 = sphi 0, %s71
      %s86 = sphi 0, %s72
      %s90 = sphi 0, %s90
      %s92 = sphi 0, %s90
      %s93 = sphi 0, %s92
      %s107 = sphi 0, %s93
      %s115 = sphi 0, %s117
      %s118 = sphi 0, %s115
      %s119 = sphi 0, %s118
      %s135 = sphi 0, %s119
      %s141 = sphi 0, %s143
      %s144 = sphi 0, %s141
      %s145 = sphi 0, %s144
      %s161 = sphi 0, %s145
    $region4: #{tpu_custom_call.1} parent=1 // loop_header_branch
      %24 = sbr.rel (%p22) target = $region8
    $region5: #{tpu_custom_call.1} parent=1 // loop_body
      %s26 = ssub.s32 %s21, 1
      %s27 = ssub.s32 %s21, 2
      %s34 = sadd.s32 1, %s29
      %p35 = scmp.ge.s32.totalorder %s34, 1
      %s36 = scalar_select %p35, 0, %s34
      %s37 = sadd.s32 1, %s28
      %s38 = scalar_select %p35, %s37, %s28
      %p39 = scmp.ge.s32.totalorder %s38, 2
      %s40 = scalar_select %p39, 0, %s38
      %s41 = ssub.s32 %s28, %s40
      %s42 = ssub.s32 %s29, %s36
      %s43 = sor.u32 %s41, %s42
      %p44 = scmp.eq.s32.totalorder %s43, 0
      %s46 = sadd.s32 %s45, 1
      %s47 = scalar_select %p44, %s45, %s46
      %p50 = pneg %p44
      %p51 = scmp.eq.s32.totalorder %s21, 1
      %p52 = por %p50, %p51
      %p53 = scmp.ne.s32.totalorder %s45, %s48
      %p54 = scmp.eq.s32.totalorder %s21, 0
      %p55 = por %p53, %p54
      %p56 = scmp.ne.s32.totalorder %s45, %s48
      %p57 = scmp.eq.s32.totalorder %s26, 1
      %p58 = por %p56, %p57
      %p59 = scmp.ne.s32.totalorder %s48, %s49
      %p60 = scmp.eq.s32.totalorder %s26, 0
      %p61 = por %p59, %p60
      %p62 = scmp.ne.s32.totalorder %s48, %s49
      %p63 = scmp.eq.s32.totalorder %s27, 1
      %p64 = por %p62, %p63
      %p66 = scmp.ne.s32.totalorder %s49, %s65
      %p67 = scmp.eq.s32.totalorder %s27, 0
      %p68 = por %p66, %p67
      %s70 = sadd.s32 %s69, 1
      %p73 = scmp.eq.s32.totalorder %s21, 1
      %p74 = scmp.ne.s32.totalorder %s69, %s71
      %p75 = scmp.eq.s32.totalorder %s21, 0
      %p76 = por %p74, %p75
      %p77 = scmp.ne.s32.totalorder %s69, %s71
      %p78 = scmp.eq.s32.totalorder %s26, 1
      %p79 = por %p77, %p78
      %p80 = scmp.ne.s32.totalorder %s71, %s72
      %p81 = scmp.eq.s32.totalorder %s26, 0
      %p82 = por %p80, %p81
      %p83 = scmp.ne.s32.totalorder %s71, %s72
      %p84 = scmp.eq.s32.totalorder %s27, 1
      %p85 = por %p83, %p84
      %p87 = scmp.ne.s32.totalorder %s72, %s86
      %p88 = scmp.eq.s32.totalorder %s27, 0
      %p89 = por %p87, %p88
      %s91 = sadd.s32 %s90, 1
      %p94 = scmp.eq.s32.totalorder %s21, 1
      %p95 = scmp.ne.s32.totalorder %s90, %s92
      %p96 = scmp.eq.s32.totalorder %s21, 0
      %p97 = por %p95, %p96
      %p98 = scmp.ne.s32.totalorder %s90, %s92
      %p99 = scmp.eq.s32.totalorder %s26, 1
      %p100 = por %p98, %p99
      %p101 = scmp.ne.s32.totalorder %s92, %s93
      %p102 = scmp.eq.s32.totalorder %s26, 0
      %p103 = por %p101, %p102
      %p104 = scmp.ne.s32.totalorder %s92, %s93
      %p105 = scmp.eq.s32.totalorder %s27, 1
      %p106 = por %p104, %p105
      %p108 = scmp.ne.s32.totalorder %s93, %s107
      %p109 = scmp.eq.s32.totalorder %s27, 0
      %p110 = por %p108, %p109
      %s111 = ssub.s32 %s28, %s40
      %s112 = ssub.s32 %s29, %s36
      %s113 = sor.u32 %s111, %s112
      %p114 = scmp.eq.s32.totalorder %s113, 0
      %s116 = sadd.s32 %s115, 1
      %s117 = scalar_select %p114, %s115, %s116
      %p120 = pneg %p114
      %p121 = scmp.eq.s32.totalorder %s21, 1
      %p122 = por %p120, %p121
      %p123 = scmp.ne.s32.totalorder %s115, %s118
      %p124 = scmp.eq.s32.totalorder %s21, 0
      %p125 = por %p123, %p124
      %p126 = scmp.ne.s32.totalorder %s115, %s118
      %p127 = scmp.eq.s32.totalorder %s26, 1
      %p128 = por %p126, %p127
      %p129 = scmp.ne.s32.totalorder %s118, %s119
      %p130 = scmp.eq.s32.totalorder %s26, 0
      %p131 = por %p129, %p130
      %p132 = scmp.ne.s32.totalorder %s118, %s119
      %p133 = scmp.eq.s32.totalorder %s27, 1
      %p134 = por %p132, %p133
      %p136 = scmp.ne.s32.totalorder %s119, %s135
      %p137 = scmp.eq.s32.totalorder %s27, 0
      %p138 = por %p136, %p137
      %s139 = ssub.s32 %s28, %s40
      %p140 = scmp.eq.s32.totalorder %s139, 0
      %s142 = sadd.s32 %s141, 1
      %s143 = scalar_select %p140, %s141, %s142
      %p146 = pneg %p140
      %p147 = scmp.eq.s32.totalorder %s21, 1
      %p148 = por %p146, %p147
      %p149 = scmp.ne.s32.totalorder %s141, %s144
      %p150 = scmp.eq.s32.totalorder %s21, 0
      %p151 = por %p149, %p150
      %p152 = scmp.ne.s32.totalorder %s141, %s144
      %p153 = scmp.eq.s32.totalorder %s26, 1
      %p154 = por %p152, %p153
      %p155 = scmp.ne.s32.totalorder %s144, %s145
      %p156 = scmp.eq.s32.totalorder %s26, 0
      %p157 = por %p155, %p156
      %p158 = scmp.ne.s32.totalorder %s144, %s145
      %p159 = scmp.eq.s32.totalorder %s27, 1
      %p160 = por %p158, %p159
      %p162 = scmp.ne.s32.totalorder %s145, %s161
      %p163 = scmp.eq.s32.totalorder %s27, 0
      %p164 = por %p162, %p163
      %p165 = scmp.le.s32.totalorder 1, %s21
      %p166 = scmp.lt.s32.totalorder %s21, 3
      %p167 = pnand %p165, %p166
      %p168 = pneg %p167
      // Predicated region
      $region9: #{tpu_custom_call.1} parent=5 // pred_check
        _
      $region10: #{tpu_custom_call.1} parent=5 // pred_check_branch
        %170 = sbr.rel (%p167) target = $region12
      $region11: #{tpu_custom_call.1} parent=5 // pred_region
        %s171 = ssub.s32 %s21, 1
        // Predicated region
        $region13: #{tpu_custom_call.1} parent=11 // pred_check
          %p172 = pneg %p82
        $region14: #{tpu_custom_call.1} parent=11 // pred_check_branch
          %174 = sbr.rel (%p172) target = $region16
        $region15: #{tpu_custom_call.1} parent=11 // pred_region
          %176 = vsyncadd [#allocation6], 0
          %s177 = sshll.u32 %s1, 4
          %s178 = int_to_ptr.hbm [resolvable:$true] %s177
          %s179 = sshll.u32 [#allocation5], 4
          %s180 = int_to_ptr.vmem [resolvable:$true] %s179
          %185 = dma.hbm_to_vmem [thread:$0]  %s178, 256, %s180, [#allocation6], 64, 64, 4
        $region16: #{tpu_custom_call.1} parent=11 // pred_fallthru
          _
        // Predicated region
        $region17: #{tpu_custom_call.1} parent=11 // pred_check
          %p186 = pneg %p103
        $region18: #{tpu_custom_call.1} parent=11 // pred_check_branch
          %188 = sbr.rel (%p186) target = $region20
        $region19: #{tpu_custom_call.1} parent=11 // pred_region
          _
        $region20: #{tpu_custom_call.1} parent=11 // pred_fallthru
          _
      $region12: #{tpu_custom_call.1} parent=5 // pred_fallthru
        _
      %p189 = scmp.lt.s32.totalorder %s21, 2
      // Predicated region
      $region21: #{tpu_custom_call.1} parent=5 // pred_check
        %p190 = pneg %p189
      $region22: #{tpu_custom_call.1} parent=5 // pred_check_branch
        %192 = sbr.rel (%p190) target = $region24
      $region23: #{tpu_custom_call.1} parent=5 // pred_region
        // Predicated region
        $region25: #{tpu_custom_call.1} parent=23 // pred_check
          %p193 = pneg %p55
        $region26: #{tpu_custom_call.1} parent=23 // pred_check_branch
          %195 = sbr.rel (%p193) target = $region28
        $region27: #{tpu_custom_call.1} parent=23 // pred_region
          %s196 = sand.u32 %s45, 1
          %s197 = scalar_lea.sflag [#allocation3], %s196
          %s198 = sand.u32 %s45, 1
          %s199 = smul.addr %s198, 4
          %s200 = scalar_lea.vmem [#allocation2], %s199
          %202 = vsyncadd %s197, 0
          %s203 = sadd.s32 %s29, %s28
          %s204 = smul.addr %s203, 4
          %s205 = scalar_lea.hbm %s0, %s204
          %s207 = sshll.u32 %s205, 4
          %s208 = int_to_ptr.hbm [resolvable:$true] %s207
          %s209 = sshll.u32 %s200, 4
          %s210 = int_to_ptr.vmem [resolvable:$true] %s209
          %212 = dma.hbm_to_vmem [thread:$0]  %s208, 64, %s210, %s197
        $region28: #{tpu_custom_call.1} parent=23 // pred_fallthru
          _
      $region24: #{tpu_custom_call.1} parent=5 // pred_fallthru
        _
      %p213 = scmp.le.s32.totalorder 1, %s21
      %p214 = scmp.lt.s32.totalorder %s21, 3
      %p215 = pnand %p213, %p214
      %p216 = pneg %p215
      // Predicated region
      $region29: #{tpu_custom_call.1} parent=5 // pred_check
        _
      $region30: #{tpu_custom_call.1} parent=5 // pred_check_branch
        %218 = sbr.rel (%p215) target = $region32
      $region31: #{tpu_custom_call.1} parent=5 // pred_region
        %s219 = ssub.s32 %s21, 1
        %s220 = sand.u32 %s48, 1
        %s221 = scalar_lea.sflag [#allocation3], %s220
        %s222 = sand.u32 %s48, 1
        %s223 = smul.addr %s222, 4
        %s224 = scalar_lea.vmem [#allocation2], %s223
        // Predicated region
        $region33: #{tpu_custom_call.1} parent=31 // pred_check
          %p225 = pneg %p61
        $region34: #{tpu_custom_call.1} parent=31 // pred_check_branch
          %227 = sbr.rel (%p225) target = $region36
        $region35: #{tpu_custom_call.1} parent=31 // pred_region
          %229 = dma.done %s221, 64
        $region36: #{tpu_custom_call.1} parent=31 // pred_fallthru
          _
        // Predicated region
        $region37: #{tpu_custom_call.1} parent=31 // pred_check
          %p230 = pneg %p82
        $region38: #{tpu_custom_call.1} parent=31 // pred_check_branch
          %232 = sbr.rel (%p230) target = $region40
        $region39: #{tpu_custom_call.1} parent=31 // pred_region
          %234 = dma.done [#allocation6], 256
        $region40: #{tpu_custom_call.1} parent=31 // pred_fallthru
          _
        %s235 = sand.u32 %s48, 1
        %s236 = scalar_lea.sflag [#allocation3], %s235
        %s237 = sand.u32 %s48, 1
        %s238 = smul.addr %s237, 4
        %s239 = scalar_lea.vmem [#allocation2], %s238
        %p240 = pneg %p61
        %p241 = pneg %p58
        %p242 = pneg %p82
        %p243 = pneg %p79
        %p244 = pneg %p103
        %p245 = pneg %p100
        %p246 = pneg %p131
        %p247 = pneg %p128
        %s248 = sand.u32 %s118, 1
        %s249 = scalar_lea.sflag [#allocation4], %s248
        %s250 = sand.u32 %s118, 1
        %s251 = smul.addr %s250, 4
        %s252 = scalar_lea.vmem [#allocation7], %s251
        %p253 = pneg %p157
        %p254 = pneg %p154
        %s255 = sand.u32 %s144, 1
        %s256 = scalar_lea.sflag [#allocation9], %s255
        %s257 = sand.u32 %s144, 1
        %s258 = smul.addr %s257, 2
        %s259 = scalar_lea.vmem [#allocation8], %s258
        %p261 = scmp.eq.s32.totalorder %s31, 0
        // Predicated region
        $region41: #{tpu_custom_call.1} parent=31 // pred_check
          %p262 = pneg %p261
        $region42: #{tpu_custom_call.1} parent=31 // pred_check_branch
          %264 = sbr.rel (%p262) target = $region44
        $region43: #{tpu_custom_call.1} parent=31 // pred_region
          %265 = vst [vmem:[%s259] sm:$0x3] 0.0
        $region44: #{tpu_custom_call.1} parent=31 // pred_fallthru
          _
        %v266 = vld [vmem:[%s224] sm:$0xf]
        %v267 = vld [vmem:[#allocation5] sm:$0xf]
        %v268 = vld [vmem:[#allocation5 + $0x4] sm:$0xf]
        %v269 = vld [vmem:[#allocation5 + $0x8] sm:$0xf]
        %v270 = vld [vmem:[#allocation5 + $0xc] sm:$0xf]
        %v271 = vld [vmem:[%s2] sm:$0x1]
        %v273 = vperm.slane %v271, 0
        %v279 = vunpack.c.l.b16 %v267
        %v280 = vunpack.c.l.b16 %v268
        %v281 = vunpack.c.l.b16 %v269
        %v282 = vunpack.c.l.b16 %v270
        %v283 = vpack.c.b16 %v280, %v279
        %v284 = vpack.c.b16 %v282, %v281
        %vm287 = vcmask 261120
        %v289 = vsel %vm287, %v266, 0
        %291 = vmatpush.bf16.msra.mxu0 0
        %292 = vmatpush.bf16.msra.mxu0 0
        %293 = vmatpush.bf16.msra.mxu0 0
        %294 = vmatpush.bf16.msra.mxu0 0
        %295 = vmatpush.bf16.msra.mxu0 0
        %296 = vmatpush.bf16.msra.mxu0 0
        %297 = vmatpush.bf16.msra.mxu0 %v284
        %298 = vmatpush.bf16.msra.mxu0 %v283
        %299 = vmatmul.bf16.gmra.mxu0 %v289
        %v300 = vpop.f32.mrf.mxu0
        %v301 = vadd.f32 %v273, %v300
        %v302 = vpop.f32.mrf.mxu0
        %303 = vdwg.mxu0
        %v304 = vmul.f32 %v301, 0.5
        %v305 = vmul.f32 %v301, 0.70710677
        %v306 = vmul.f32 %v305, %v305
        %v307 = vmin.f32 16.0, %v306
        %v308 = vmul.f32 %v307, 2.1237322e-06
        %v309 = vadd.f32 %v308, 0.00028619796
        %v310 = vmul.f32 %v307, %v309
        %v311 = vadd.f32 %v310, 0.0036580483
        %v312 = vmul.f32 %v307, %v311
        %v313 = vadd.f32 %v312, 0.05243302
        %v314 = vmul.f32 %v307, %v313
        %v315 = vadd.f32 %v314, 0.18741608
        %v316 = vmul.f32 %v307, %v315
        %v317 = vadd.f32 %v316, 1.1283791
        %v318 = vmul.f32 %v305, %v317
        %v319 = vmul.f32 %v307, 3.8918573e-05
        %v320 = vadd.f32 %v319, 0.001143296
        %v321 = vmul.f32 %v307, %v320
        %v322 = vadd.f32 %v321, 0.014752088
        %v323 = vmul.f32 %v307, %v322
        %v324 = vadd.f32 %v323, 0.112945676
        %v325 = vmul.f32 %v307, %v324
        %v326 = vadd.f32 %v325, 0.4994258
        %v327 = vmul.f32 %v307, %v326
        %v328 = vadd.f32 %v327, 1.0
        %v329 = vrcp.pop %v328
        %v330 = vmul.f32 %v328, %v329
        %v331 = vsub.f32 1.0, %v330
        %v332 = vmul.f32 %v329, %v331
        %v333 = vadd.f32 %v329, %v332
        %vm334 = vweird.f32 %v328
        %vm335 = vweird.f32 %v329
        %vm336 = vmor %vm334, %vm335
        %v337 = vsel %vm336, %v329, %v333
        %v338 = vand.u32 2147483647, %v328
        %vm339 = vcmp.eq.f32.partialorder %v338, 8.507059e+37
        %v340 = vand.u32 %v328, 2147483648
        %v341 = vor.u32 1.1754944e-38, %v340
        %v342 = vsel %vm339, %v341, %v337
        %v343 = vmul.f32 %v318, %v342
        %v344 = vmin.f32 %v343, 1.0
        %v345 = vmax.f32 %v344, -1.0
        %v346 = vadd.f32 %v345, 1.0
        %v347 = vmul.f32 %v304, %v346
        %v348 = vsel %vm287, %v347, 0.0
        %349 = vadd.xlane.f32.xlu0 %v348
        %v350 = vpop.xlane.xlu0 %349
        %v351 = vrot.slane %v350, 4
        %v352 = vadd.f32 %v350, %v351
        %v353 = vrot.slane %v352, 2
        %v354 = vadd.f32 %v352, %v353
        %v355 = vrot.slane %v354, 1
        %v356 = vadd.f32 %v354, %v355
        %s357 = vtos %v356
        %v358 = vmul.f32 %v347, %v347
        %v359 = vsel %vm287, %v358, 0.0
        %360 = vadd.xlane.f32.xlu0 %v359
        %v361 = vpop.xlane.xlu0 %360
        %v362 = vrot.slane %v361, 4
        %v363 = vadd.f32 %v361, %v362
        %v364 = vrot.slane %v363, 2
        %v365 = vadd.f32 %v363, %v364
        %v366 = vrot.slane %v365, 1
        %v367 = vadd.f32 %v365, %v366
        %s368 = vtos %v367
        %v369 = vlaneseq
        %v370 = vshrl.u32 %v369, 7
        %vm371 = vcmp.eq.s32.totalorder %v370, 0
        %v372 = vstv %s357
        %v373 = vstv %s368
        %v374 = vsel %vm371, %v372, %v373
        %v375 = vld [vmem:[%s259] sm:$0x3]
        %v376 = vadd.f32 %v375, %v374
        %377 = vst [vmem:[%s259] sm:$0x3] %v376
        %v378 = vpack.c.bf16 %v347, %v347
        %vm379 = vcmask 257024
        %380 = vst.msk [vmem:[%s252] sm:$0xf] %vm379, %v378
        %s381 = sand.u32 %s118, 1
        %s382 = scalar_lea.sflag [#allocation4], %s381
        %s383 = sand.u32 %s118, 1
        %s384 = smul.addr %s383, 4
        %s385 = scalar_lea.vmem [#allocation7], %s384
        %s386 = sand.u32 %s144, 1
        %s387 = scalar_lea.sflag [#allocation9], %s386
        %s388 = sand.u32 %s144, 1
        %s389 = smul.addr %s388, 2
        %s390 = scalar_lea.vmem [#allocation8], %s389
        // Predicated region
        $region45: #{tpu_custom_call.1} parent=31 // pred_check
          %p391 = pneg %p128
        $region46: #{tpu_custom_call.1} parent=31 // pred_check_branch
          %393 = sbr.rel (%p391) target = $region48
        $region47: #{tpu_custom_call.1} parent=31 // pred_region
          %395 = vsyncadd %s382, 0
          %s396 = sadd.s32 %s31, %s30
          %s397 = smul.addr %s396, 4
          %s398 = scalar_lea.hbm %s3, %s397
          %s400 = sshll.u32 %s385, 4
          %s401 = int_to_ptr.vmem [resolvable:$true] %s400
          %s402 = sshll.u32 %s398, 4
          %s403 = int_to_ptr.hbm [resolvable:$true] %s402
          %405 = dma.vmem_to_hbm [thread:$0]  %s401, 64, %s403, %s382
        $region48: #{tpu_custom_call.1} parent=31 // pred_fallthru
          _
        // Predicated region
        $region49: #{tpu_custom_call.1} parent=31 // pred_check
          %p406 = pneg %p154
        $region50: #{tpu_custom_call.1} parent=31 // pred_check_branch
          %408 = sbr.rel (%p406) target = $region52
        $region51: #{tpu_custom_call.1} parent=31 // pred_region
          %410 = vsyncadd %s387, 0
          %s411 = smul.addr %s30, 2
          %s412 = scalar_lea.hbm %s4, %s411
          %s414 = sshll.u32 %s390, 4
          %s415 = int_to_ptr.vmem [resolvable:$true] %s414
          %s416 = sshll.u32 %s412, 4
          %s417 = int_to_ptr.hbm [resolvable:$true] %s416
          %419 = dma.vmem_to_hbm [thread:$0]  %s415, 32, %s417, %s387
        $region52: #{tpu_custom_call.1} parent=31 // pred_fallthru
          _
      $region32: #{tpu_custom_call.1} parent=5 // pred_fallthru
        _
      %p420 = scmp.le.s32.totalorder 2, %s21
      // Predicated region
      $region53: #{tpu_custom_call.1} parent=5 // pred_check
        %p421 = pneg %p420
      $region54: #{tpu_custom_call.1} parent=5 // pred_check_branch
        %423 = sbr.rel (%p421) target = $region56
      $region55: #{tpu_custom_call.1} parent=5 // pred_region
        %s424 = ssub.s32 %s21, 2
        // Predicated region
        $region57: #{tpu_custom_call.1} parent=55 // pred_check
          %p425 = pneg %p134
        $region58: #{tpu_custom_call.1} parent=55 // pred_check_branch
          %427 = sbr.rel (%p425) target = $region60
        $region59: #{tpu_custom_call.1} parent=55 // pred_region
          %s428 = sand.u32 %s119, 1
          %s429 = scalar_lea.sflag [#allocation4], %s428
          %s430 = sand.u32 %s119, 1
          %s431 = smul.addr %s430, 4
          %s432 = scalar_lea.vmem [#allocation7], %s431
          %434 = dma.done %s429, 64
        $region60: #{tpu_custom_call.1} parent=55 // pred_fallthru
          _
        // Predicated region
        $region61: #{tpu_custom_call.1} parent=55 // pred_check
          %p435 = pneg %p160
        $region62: #{tpu_custom_call.1} parent=55 // pred_check_branch
          %437 = sbr.rel (%p435) target = $region64
        $region63: #{tpu_custom_call.1} parent=55 // pred_region
          %s438 = sand.u32 %s145, 1
          %s439 = scalar_lea.sflag [#allocation9], %s438
          %s440 = sand.u32 %s145, 1
          %s441 = smul.addr %s440, 2
          %s442 = scalar_lea.vmem [#allocation8], %s441
          %444 = dma.done %s439, 32
        $region64: #{tpu_custom_call.1} parent=55 // pred_fallthru
          _
      $region56: #{tpu_custom_call.1} parent=5 // pred_fallthru
        _
    $region6: #{tpu_custom_call.1} parent=1 // loop_footer
      %s25 = sadd.s32 1, %s21
    $region7: #{tpu_custom_call.1} parent=1 // loop_footer_branch
      %20 = sbr.rel target = $region3
    $region8: #{tpu_custom_call.1} parent=1 // loop_exit
      _
    %445 = vsyncpa [#allocation3], 1
    %s446 = scalar_lea.sflag [#allocation3], 1
    %447 = vsyncpa %s446, 1
    %448 = vsyncpa [#allocation6], 1
    %449 = vsyncpa [#allocation4], 1
    %s450 = scalar_lea.sflag [#allocation4], 1
    %451 = vsyncpa %s450, 1
    %452 = vsyncpa [#allocation9], 1
    %s453 = scalar_lea.sflag [#allocation9], 1
    %454 = vsyncpa %s453, 1

</llo_original>
